<compile_context>
chip_gen: v7x
topology: tpu7x:2x2x1
jax: 0.10.0
libtpu: 0.0.40
codegen_flags: <defaults>
</compile_context>

<pallas_src>
import jax
import jax.numpy as jnp
from jax.experimental import pallas as pl
from jax.experimental.pallas import tpu as pltpu


_LANE = 128       # vreg lane width
_SUBLANE = 8      # f32 sublane count
_MXU_M = 256      # token tile (matmul M) target: fills the 256x256 MXU on v6e/v7x
_VK = 128         # vocab (matmul K) chunk per MXU push, lane-dense
_MAX_UNROLL = 8   # fully unroll the K loop only when it is short


def _round_up(x: int, m: int) -> int:
    return ((x + m - 1) // m) * m


def _id_embedding_kernel(ids_ref, table_ref, out_ref):
    """One grid step == one tile of TM tokens.

    ids_ref   : (TM, 1)  int32    -- token ids for this tile (tokens on sublanes)
    table_ref : (Vp, Dp) float32  -- full table, VMEM resident (single buffer)
    out_ref   : (TM, Dp) float32  -- output tile
    """
    ids = ids_ref[...]                                  # (TM, 1) int32
    tm = out_ref.shape[0]
    vocab_p, dim_p = table_ref.shape
    vk = min(_VK, vocab_p)
    num_k = vocab_p // vk

    # Hoisted: constant lane-index pattern reused by every K chunk.
    col = jax.lax.broadcasted_iota(jnp.int32, (tm, vk), 1)   # (TM, vk)

    def body(k, acc):
        k0 = pl.multiple_of(k * vk, vk)
        one_hot = (col == (ids - k0)).astype(table_ref.dtype)   # (TM, vk)
        tab = table_ref[pl.ds(k0, vk), :]                       # (vk, Dp)
        return acc + jnp.dot(one_hot, tab, preferred_element_type=jnp.float32)

    acc = jax.lax.fori_loop(
        0, num_k, body,
        jnp.zeros((tm, dim_p), jnp.float32),
        unroll=(num_k <= _MAX_UNROLL))
    out_ref[...] = acc.astype(out_ref.dtype)


def id_embedding(input_ids: jax.Array, table: jax.Array) -> jax.Array:
    """Pallas equivalent of IdEmbedding.forward.

    input_ids: (B, S) integer ids
    table    : (V, D) float32 embedding table (padding_idx row already zeroed)
    returns  : (B, S, D) float32
    """
    batch, seq = input_ids.shape
    vocab, dim = table.shape

    # Lane-pad vocab (matmul K) and dim (matmul N / store lanes).
    vocab_p = _round_up(vocab, _LANE)
    dim_p = _round_up(dim, _LANE)
    table_p = jnp.pad(table, ((0, vocab_p - vocab), (0, dim_p - dim)))

    # Flatten (B, S) -> token axis, pick an MXU-sized token tile.
    tokens = batch * seq
    tm = _MXU_M if tokens >= _MXU_M else _round_up(tokens, _SUBLANE)
    tokens_p = _round_up(tokens, tm)
    ids_flat = input_ids.reshape(-1).astype(jnp.int32)
    ids_col = jnp.pad(ids_flat, (0, tokens_p - tokens)).reshape(tokens_p, 1)

    grid = (tokens_p // tm,)

    # VMEM budget: single-buffered table + double-buffered ids/out tiles.
    table_bytes = vocab_p * dim_p * 4
    tile_bytes = 2 * (tm * dim_p * 4 + tm * 4)
    if table_bytes + tile_bytes > (40 << 20):
        # TODO(synk): DMA row-gather path for vocabularies too large to keep
        # the table resident in VMEM (pl.ANY table + per-row async copies).
        raise NotImplementedError(
            "vocab too large for the VMEM-resident one-hot path")
    vmem_limit = min(max(16 << 20, 2 * table_bytes + tile_bytes + (4 << 20)),
                     56 << 20)

    def _call(table_spec):
        return pl.pallas_call(
            _id_embedding_kernel,
            out_shape=jax.ShapeDtypeStruct((tokens_p, dim_p), table.dtype),
            grid=grid,
            in_specs=[
                pl.BlockSpec((tm, 1), lambda t: (t, 0)),   # ids tile per step
                table_spec,                                # full table
            ],
            out_specs=pl.BlockSpec((tm, dim_p), lambda t: (t, 0)),
            compiler_params=pltpu.CompilerParams(
                dimension_semantics=("parallel",),
                vmem_limit_bytes=vmem_limit,
            ),
        )(ids_col, table_p)

    try:
        # Preferred: single-buffered, fully VMEM-resident table (halves the
        # resident table footprint -- matters on v7x's 64 MiB VMEM).
        out_flat = _call(pl.BlockSpec(memory_space=pltpu.MemorySpace.VMEM))
    except Exception:
        # Fallback: full-extent block with a constant index map (Pallas skips
        # re-fetching the unchanged block) -- always supported.
        out_flat = _call(pl.BlockSpec((vocab_p, dim_p), lambda t: (0, 0)))

    return out_flat[:tokens, :dim].reshape(batch, seq, dim)


def init_id_embedding_params(key, id_num: int, embedding_dim: int,
                             padding_idx: int) -> jax.Array:
    """Mirror nn.Embedding init: N(0,1) weights with the padding_idx row zeroed."""
    table = jax.random.normal(key, (id_num, embedding_dim), dtype=jnp.float32)
    table = table.at[padding_idx].set(0.0)
    return table


if __name__ == "__main__":
    # Module config (small, consistent with the forward pass).
    id_num = 64          # vocabulary size
    embedding_dim = 128  # hidden size (lane-aligned)
    padding_idx = 0

    batch, seq = 2, 8

    key = jax.random.PRNGKey(0)
    k_table, k_ids = jax.random.split(key)

    table = init_id_embedding_params(k_table, id_num, embedding_dim, padding_idx)

    input_ids = jax.random.randint(k_ids, (batch, seq), 0, id_num, dtype=jnp.int32)
    # Force a couple of padding tokens so padding_idx semantics are exercised.
    input_ids = input_ids.at[0, 0].set(padding_idx)
    input_ids = input_ids.at[1, 3].set(padding_idx)

    out = id_embedding(input_ids, table)
    out = jax.block_until_ready(out)

    # Pure-JAX reference: plain gather (padding row is already zero in `table`).
    ref = table[input_ids]
    assert out.shape == (batch, seq, embedding_dim)
    assert jnp.allclose(out, ref, atol=1e-6), "mismatch vs reference gather"
    assert jnp.allclose(out[0, 0], 0.0), "padding_idx row must be zero"

    print("KERNEL_OK")
</pallas_src>

<mosaic_0001>
module attributes {stable_mosaic.version = 11 : i64} {
  func.func @_id_embedding_kernel(%arg0: i32, %arg1: memref<16x1xi32, #tpu.memory_space<vmem>>, %arg2: memref<128x128xf32, #tpu.memory_space<vmem>>, %arg3: memref<16x128xf32, #tpu.memory_space<vmem>>) attributes {dimension_semantics = [#tpu.dimension_semantics<parallel>], iteration_bounds = array<i64: 1>, scalar_prefetch = 0 : i64, scratch_operands = 0 : i64, tpu.core_type = #tpu.core_type<tc>, window_params = [{transform_indices = @transform_0, window_bounds = array<i64: 16, 1>}, {pipeline_mode = #tpu.pipeline_mode<synchronous>, transform_indices = @transform_1, window_bounds = array<i64: 128, 128>}, {transform_indices = @transform_2, window_bounds = array<i64: 16, 128>}]} {
    %c0 = arith.constant 0 : index
    %c0_0 = arith.constant 0 : index
    %0 = vector.load %arg1[%c0, %c0_0] : memref<16x1xi32, #tpu.memory_space<vmem>>, vector<16x1xi32>
    %1 = tpu.iota {dimensions = array<i32: 1>} : vector<16x128xi32>
    %cst = arith.constant 0.000000e+00 : f32
    %2 = vector.broadcast %cst : f32 to vector<16x128xf32>
    %c0_i32 = arith.constant 0 : i32
    %c128_i32 = arith.constant 128 : i32
    %3 = arith.muli %c0_i32, %c128_i32 : i32
    %4 = tpu.assume_multiple %3, 128 : i32
    %5 = vector.broadcast %4 : i32 to vector<16x1xi32>
    %6 = arith.subi %0, %5 : vector<16x1xi32>
    %7 = vector.broadcast %6 : vector<16x1xi32> to vector<16x128xi32>
    %8 = arith.cmpi eq, %1, %7 : vector<16x128xi32>
    %9 = arith.extui %8 : vector<16x128xi1> to vector<16x128xi32>
    %10 = arith.sitofp %9 : vector<16x128xi32> to vector<16x128xf32>
    %11 = arith.index_cast %4 : i32 to index
    %c0_1 = arith.constant 0 : index
    %12 = vector.load %arg2[%11, %c0_1] : memref<128x128xf32, #tpu.memory_space<vmem>>, vector<128x128xf32>
    %cst_2 = arith.constant dense<0.000000e+00> : vector<16x128xf32>
    %13 = tpu.matmul %10, %12, %cst_2 {dimension_numbers = #tpu.dot_dimension_numbers<[1], [0], [0], [1], [0, 0, 1, 1], [], []>} : vector<16x128xf32>, vector<128x128xf32>, vector<16x128xf32> -> vector<16x128xf32>
    %14 = arith.addf %2, %13 : vector<16x128xf32>
    %c1_i32 = arith.constant 1 : i32
    %c0_3 = arith.constant 0 : index
    %c0_4 = arith.constant 0 : index
    %15 = vector.load %arg3[%c0_3, %c0_4] : memref<16x128xf32, #tpu.memory_space<vmem>>, vector<16x128xf32>
    tpu.vector_store %arg3[%c0_3, %c0_4], %14 {strides = array<i32>} : memref<16x128xf32, #tpu.memory_space<vmem>>, vector<16x128xf32>,
    return
  }
  func.func @transform_0(%arg0: i32) -> (i32, i32) {
    %c0_i32 = arith.constant 0 : i32
    %c0_i32_0 = arith.constant 0 : i32
    return %arg0, %c0_i32 : i32, i32
  }
  func.func @transform_1(%arg0: i32) -> (i32, i32) {
    %c0_i32 = arith.constant 0 : i32
    %c0_i32_0 = arith.constant 0 : i32
    %c0_i32_1 = arith.constant 0 : i32
    return %c0_i32, %c0_i32_0 : i32, i32
  }
  func.func @transform_2(%arg0: i32) -> (i32, i32) {
    %c0_i32 = arith.constant 0 : i32
    %c0_i32_0 = arith.constant 0 : i32
    return %arg0, %c0_i32 : i32, i32
  }
}

module attributes {stable_mosaic.version = 11 : i64} {
  func.func @_id_embedding_kernel(%arg0: i32, %arg1: memref<16x1xi32, #tpu.memory_space<vmem>>, %arg2: memref<128x128xf32, #tpu.memory_space<vmem>>, %arg3: memref<16x128xf32, #tpu.memory_space<vmem>>) attributes {dimension_semantics = [#tpu.dimension_semantics<parallel>], iteration_bounds = array<i64: 1>, scalar_prefetch = 0 : i64, scratch_operands = 0 : i64, tpu.core_type = #tpu.core_type<tc>, window_params = [{transform_indices = @transform_0, window_bounds = array<i64: 16, 1>}, {pipeline_mode = #tpu.pipeline_mode<synchronous>, transform_indices = @transform_1, window_bounds = array<i64: 128, 128>}, {transform_indices = @transform_2, window_bounds = array<i64: 16, 128>}]} {
    %c0 = arith.constant 0 : index
    %c0_0 = arith.constant 0 : index
    %0 = vector.load %arg1[%c0, %c0_0] : memref<16x1xi32, #tpu.memory_space<vmem>>, vector<16x1xi32>
    %1 = tpu.iota {dimensions = array<i32: 1>} : vector<16x128xi32>
    %cst = arith.constant 0.000000e+00 : f32
    %2 = vector.broadcast %cst : f32 to vector<16x128xf32>
    %c0_i32 = arith.constant 0 : i32
    %c128_i32 = arith.constant 128 : i32
    %3 = arith.muli %c0_i32, %c128_i32 : i32
    %4 = tpu.assume_multiple %3, 128 : i32
    %5 = vector.broadcast %4 : i32 to vector<16x1xi32>
    %6 = arith.subi %0, %5 : vector<16x1xi32>
    %7 = vector.broadcast %6 : vector<16x1xi32> to vector<16x128xi32>
    %8 = arith.cmpi eq, %1, %7 : vector<16x128xi32>
    %9 = arith.extui %8 : vector<16x128xi1> to vector<16x128xi32>
    %10 = arith.sitofp %9 : vector<16x128xi32> to vector<16x128xf32>
    %11 = arith.index_cast %4 : i32 to index
    %c0_1 = arith.constant 0 : index
    %12 = vector.load %arg2[%11, %c0_1] : memref<128x128xf32, #tpu.memory_space<vmem>>, vector<128x128xf32>
    %cst_2 = arith.constant dense<0.000000e+00> : vector<16x128xf32>
    %13 = tpu.matmul %10, %12, %cst_2 {dimension_numbers = #tpu.dot_dimension_numbers<[1], [0], [0], [1], [0, 0, 1, 1], [], []>} : vector<16x128xf32>, vector<128x128xf32>, vector<16x128xf32> -> vector<16x128xf32>
    %14 = arith.addf %2, %13 : vector<16x128xf32>
    %c1_i32 = arith.constant 1 : i32
    %c0_3 = arith.constant 0 : index
    %c0_4 = arith.constant 0 : index
    %15 = vector.load %arg3[%c0_3, %c0_4] : memref<16x128xf32, #tpu.memory_space<vmem>>, vector<16x128xf32>
    tpu.vector_store %arg3[%c0_3, %c0_4], %14 {strides = array<i32>} : memref<16x128xf32, #tpu.memory_space<vmem>>, vector<16x128xf32>,
    return
  }
  func.func @transform_0(%arg0: i32) -> (i32, i32) {
    %c0_i32 = arith.constant 0 : i32
    %c0_i32_0 = arith.constant 0 : i32
    return %arg0, %c0_i32 : i32, i32
  }
  func.func @transform_1(%arg0: i32) -> (i32, i32) {
    %c0_i32 = arith.constant 0 : i32
    %c0_i32_0 = arith.constant 0 : i32
    %c0_i32_1 = arith.constant 0 : i32
    return %c0_i32, %c0_i32_0 : i32, i32
  }
  func.func @transform_2(%arg0: i32) -> (i32, i32) {
    %c0_i32 = arith.constant 0 : i32
    %c0_i32_0 = arith.constant 0 : i32
    return %arg0, %c0_i32 : i32, i32
  }
}

</mosaic_0001>

<llo_original>
// kernel: tpu_custom_call.1
$region0: #{tpu_custom_call.1}
  #allocation0 [shape = 'u32[]', space=smem, size = 0x4, offset = 0x4, fixed_abs, tag = 'smem constant byte address 0x4 - core index']
  #allocation1 [shape = 'u32[144,128]{1,0:T(1,128)}', space=vmem, size = 0x12000, scoped, tag = 'internal scratch']
  %s0 = inlined_call_operand.vmem [shape: s32[16,1], index: 0, kind: input, shape index: {}]
  %s1 = inlined_call_operand.hbm [shape: f32[128,128], index: 1, kind: input, shape index: {}]
  %s2 = inlined_call_operand.hbm [shape: f32[16,128], index: 2, kind: output, shape index: {}]
  %s3 = sld [smem:[#allocation0]]
  $region22: #{tpu_custom_call.1} parent=0
    _
  %s5 = ssub.s32 1, %s3
  %s6 = scalar_select 0, %s5, %s3
  $region1: #{tpu_custom_call.1} parent=0
    #allocation2 [shape = 'u8[65536]{0}', space=vmem, size = 0x10000, scoped, tag = 'input window, operand 1, single buffered']
    #allocation3 [shape = 's32[1]{0}', space=sflag, size = 0x4, scoped, tag = 'scoped memory for tpu_custom_call.1']
    #allocation4 [shape = 's32[1]{0}', space=sflag, size = 0x4, scoped, tag = 'scoped memory for tpu_custom_call.1']
    #allocation5 [shape = 'u8[8192]{0}', space=vmem, size = 0x2000, scoped, tag = 'output window, operand 0, single buffered']
    %7 = vsyncpa [#allocation3], 0
    %8 = vsyncpa [#allocation4], 0
    // Predicated region
    $region2: #{tpu_custom_call.1} parent=1 // pred_check
      _
    $region3: #{tpu_custom_call.1} parent=1 // pred_check_branch
      %10 = sbr.rel (0) target = $region5
    $region4: #{tpu_custom_call.1} parent=1 // pred_region
      _
    $region5: #{tpu_custom_call.1} parent=1 // pred_fallthru
      _
    // Predicated region
    $region6: #{tpu_custom_call.1} parent=1 // pred_check
      _
    $region7: #{tpu_custom_call.1} parent=1 // pred_check_branch
      %12 = sbr.rel (0) target = $region9
    $region8: #{tpu_custom_call.1} parent=1 // pred_region
      %s14 = ssub.s32 2048, 2048
      %15 = vsyncadd [#allocation3], %s14
      %s16 = sshll.u32 [#allocation2], 4
      %s17 = int_to_ptr.vmem [resolvable:$true] %s16
      %22 = dma.hbm_to_vmem [thread:$0]  %s1, 2048, %s17, [#allocation3], 128, 128, 8
    $region9: #{tpu_custom_call.1} parent=1 // pred_fallthru
      _
    // Predicated region
    $region10: #{tpu_custom_call.1} parent=1 // pred_check
      _
    $region11: #{tpu_custom_call.1} parent=1 // pred_check_branch
      %24 = sbr.rel (0) target = $region13
    $region12: #{tpu_custom_call.1} parent=1 // pred_region
      %25 = dma.done [#allocation3], 2048
    $region13: #{tpu_custom_call.1} parent=1 // pred_fallthru
      _
    %v26 = vld [vmem:[%s0] sm:$0xff]
    %v27 = vld [vmem:[%s0 + $0x8] sm:$0xff]
    %v28 = vlaneseq
    %v29 = vand.u32 %v28, 127
    %v30 = vstv 0
    %v31 = vsub.s32 %v26, %v30
    %v32 = vsub.s32 %v27, %v30
    %33 = vset.pattern.permute.xlu0 0
    %34 = vperm.xlu0 %33, %v31
    %v35 = vpop.permute.xlu0 %34
    %36 = vset.pattern.permute.xlu0 0
    %37 = vperm.xlu0 %36, %v32
    %v38 = vpop.permute.xlu0 %37
    %vm39 = vcmp.eq.s32.totalorder %v29, %v35
    %vm40 = vcmp.eq.s32.totalorder %v29, %v38
    %v41 = vsel %vm39, 1, 0
    %v42 = vsel %vm40, 1, 0
    %v43 = vcvt.s32.f32 %v41
    %v44 = vcvt.s32.f32 %v42
    %v45 = vld [vmem:[#allocation2] sm:$0xff]
    %v46 = vld [vmem:[#allocation2 + $0x8] sm:$0xff]
    %v47 = vld [vmem:[#allocation2 + $0x10] sm:$0xff]
    %v48 = vld [vmem:[#allocation2 + $0x18] sm:$0xff]
    %v49 = vld [vmem:[#allocation2 + $0x20] sm:$0xff]
    %v50 = vld [vmem:[#allocation2 + $0x28] sm:$0xff]
    %v51 = vld [vmem:[#allocation2 + $0x30] sm:$0xff]
    %v52 = vld [vmem:[#allocation2 + $0x38] sm:$0xff]
    %v53 = vld [vmem:[#allocation2 + $0x40] sm:$0xff]
    %v54 = vld [vmem:[#allocation2 + $0x48] sm:$0xff]
    %v55 = vld [vmem:[#allocation2 + $0x50] sm:$0xff]
    %v56 = vld [vmem:[#allocation2 + $0x58] sm:$0xff]
    %v57 = vld [vmem:[#allocation2 + $0x60] sm:$0xff]
    %v58 = vld [vmem:[#allocation2 + $0x68] sm:$0xff]
    %v59 = vld [vmem:[#allocation2 + $0x70] sm:$0xff]
    %v60 = vld [vmem:[#allocation2 + $0x78] sm:$0xff]
    %61 = vmatprep.subr.mxu0 0.0
    %62 = vmatpush1.msra.mxu0 %v45
    %63 = vmatprep.subr.mxu0 0.0
    %64 = vmatpush1.msra.mxu0 %v46
    %65 = vmatprep.subr.mxu0 0.0
    %66 = vmatpush1.msra.mxu0 %v47
    %67 = vmatprep.subr.mxu0 0.0
    %68 = vmatpush1.msra.mxu0 %v48
    %69 = vmatprep.subr.mxu0 0.0
    %70 = vmatpush1.msra.mxu0 %v49
    %71 = vmatprep.subr.mxu0 0.0
    %72 = vmatpush1.msra.mxu0 %v50
    %73 = vmatprep.subr.mxu0 0.0
    %74 = vmatpush1.msra.mxu0 %v51
    %75 = vmatprep.subr.mxu0 0.0
    %76 = vmatpush1.msra.mxu0 %v52
    %77 = vmatprep.subr.mxu0 0.0
    %78 = vmatpush1.msra.mxu0 %v53
    %79 = vmatprep.subr.mxu0 0.0
    %80 = vmatpush1.msra.mxu0 %v54
    %81 = vmatprep.subr.mxu0 0.0
    %82 = vmatpush1.msra.mxu0 %v55
    %83 = vmatprep.subr.mxu0 0.0
    %84 = vmatpush1.msra.mxu0 %v56
    %85 = vmatprep.subr.mxu0 0.0
    %86 = vmatpush1.msra.mxu0 %v57
    %87 = vmatprep.subr.mxu0 0.0
    %88 = vmatpush1.msra.mxu0 %v58
    %89 = vmatprep.subr.mxu0 0.0
    %90 = vmatpush1.msra.mxu0 %v59
    %91 = vmatprep.subr.mxu0 0.0
    %92 = vmatpush1.msra.mxu0 %v60
    %93 = vmatprep.subr.mxu0 0.0
    %94 = vmatpush1.msra.mxu0 0.0
    %95 = vmatprep.subr.mxu0 0.0
    %96 = vmatpush1.msra.mxu0 0.0
    %97 = vmatprep.subr.mxu0 0.0
    %98 = vmatpush1.msra.mxu0 0.0
    %99 = vmatprep.subr.mxu0 0.0
    %100 = vmatpush1.msra.mxu0 0.0
    %101 = vmatprep.subr.mxu0 0.0
    %102 = vmatpush1.msra.mxu0 0.0
    %103 = vmatprep.subr.mxu0 0.0
    %104 = vmatpush1.msra.mxu0 0.0
    %105 = vmatprep.subr.mxu0 0.0
    %106 = vmatpush1.msra.mxu0 0.0
    %107 = vmatprep.subr.mxu0 0.0
    %108 = vmatpush1.msra.mxu0 0.0
    %109 = vmatprep.subr.mxu0 0.0
    %110 = vmatpush1.msra.mxu0 0.0
    %111 = vmatprep.subr.mxu0 0.0
    %112 = vmatpush1.msra.mxu0 0.0
    %113 = vmatprep.subr.mxu0 0.0
    %114 = vmatpush1.msra.mxu0 0.0
    %115 = vmatprep.subr.mxu0 0.0
    %116 = vmatpush1.msra.mxu0 0.0
    %117 = vmatprep.subr.mxu0 0.0
    %118 = vmatpush1.msra.mxu0 0.0
    %119 = vmatprep.subr.mxu0 0.0
    %120 = vmatpush1.msra.mxu0 0.0
    %121 = vmatprep.subr.mxu0 0.0
    %122 = vmatpush1.msra.mxu0 0.0
    %123 = vmatprep.subr.mxu0 0.0
    %124 = vmatpush1.msra.mxu0 0.0
    %125 = vmatprep.mubr.f32.mxu0 0.0
    %126 = vmatmul.mubr.f32.gmra.mrb[0].mxu0 %v43
    %v127 = vpop.f32.mrb[0].mxu0
    %v128 = vadd.f32 0.0, %v127
    %v129 = vpop.f32.mrb[0].mxu0
    %130 = vmatprep.mubr.f32.mxu0 0.0
    %131 = vmatmul.mubr.f32.gmra.mrb[0].mxu0 %v44
    %v132 = vpop.f32.mrb[0].mxu0
    %v133 = vadd.f32 0.0, %v132
    %v134 = vpop.f32.mrb[0].mxu0
    %135 = vdwg.mxu0
    %136 = vst [vmem:[#allocation5] sm:$0xff] %v128
    %137 = vst [vmem:[#allocation5 + $0x8] sm:$0xff] %v133
    // Predicated region
    $region14: #{tpu_custom_call.1} parent=1 // pred_check
      _
    $region15: #{tpu_custom_call.1} parent=1 // pred_check_branch
      %139 = sbr.rel (0) target = $region17
    $region16: #{tpu_custom_call.1} parent=1 // pred_region
      %s141 = ssub.s32 256, 256
      %142 = vsyncadd [#allocation4], %s141
      %s143 = sshll.u32 [#allocation5], 4
      %s144 = int_to_ptr.vmem [resolvable:$true] %s143
      %149 = dma.vmem_to_hbm [thread:$0]  %s144, 256, %s2, [#allocation4], 128, 128, 8
    $region17: #{tpu_custom_call.1} parent=1 // pred_fallthru
      _
    // Predicated region
    $region18: #{tpu_custom_call.1} parent=1 // pred_check
      _
    $region19: #{tpu_custom_call.1} parent=1 // pred_check_branch
      %151 = sbr.rel (0) target = $region21
    $region20: #{tpu_custom_call.1} parent=1 // pred_region
      %152 = dma.done [#allocation4], 256
    $region21: #{tpu_custom_call.1} parent=1 // pred_fallthru
      _
    %153 = vsyncpa [#allocation3], 1
    %154 = vsyncpa [#allocation4], 1

// kernel: tpu_custom_call.1
$region0: #{tpu_custom_call.1}
  #allocation0 [shape = 'u32[]', space=smem, size = 0x4, offset = 0x4, fixed_abs, tag = 'smem constant byte address 0x4 - core index']
  #allocation1 [shape = 'u32[144,128]{1,0:T(1,128)}', space=vmem, size = 0x12000, scoped, tag = 'internal scratch']
  %s0 = inlined_call_operand.vmem [shape: s32[16,1], index: 0, kind: input, shape index: {}]
  %s1 = inlined_call_operand.hbm [shape: f32[128,128], index: 1, kind: input, shape index: {}]
  %s2 = inlined_call_operand.hbm [shape: f32[16,128], index: 2, kind: output, shape index: {}]
  %s3 = sld [smem:[#allocation0]]
  $region22: #{tpu_custom_call.1} parent=0
    _
  %s5 = ssub.s32 1, %s3
  %s6 = scalar_select 0, %s5, %s3
  $region1: #{tpu_custom_call.1} parent=0
    #allocation2 [shape = 'u8[65536]{0}', space=vmem, size = 0x10000, scoped, tag = 'input window, operand 1, single buffered']
    #allocation3 [shape = 's32[1]{0}', space=sflag, size = 0x4, scoped, tag = 'scoped memory for tpu_custom_call.1']
    #allocation4 [shape = 's32[1]{0}', space=sflag, size = 0x4, scoped, tag = 'scoped memory for tpu_custom_call.1']
    #allocation5 [shape = 'u8[8192]{0}', space=vmem, size = 0x2000, scoped, tag = 'output window, operand 0, single buffered']
    %7 = vsyncpa [#allocation3], 0
    %8 = vsyncpa [#allocation4], 0
    // Predicated region
    $region2: #{tpu_custom_call.1} parent=1 // pred_check
      _
    $region3: #{tpu_custom_call.1} parent=1 // pred_check_branch
      %10 = sbr.rel (0) target = $region5
    $region4: #{tpu_custom_call.1} parent=1 // pred_region
      _
    $region5: #{tpu_custom_call.1} parent=1 // pred_fallthru
      _
    // Predicated region
    $region6: #{tpu_custom_call.1} parent=1 // pred_check
      _
    $region7: #{tpu_custom_call.1} parent=1 // pred_check_branch
      %12 = sbr.rel (0) target = $region9
    $region8: #{tpu_custom_call.1} parent=1 // pred_region
      %s14 = ssub.s32 2048, 2048
      %15 = vsyncadd [#allocation3], %s14
      %s16 = sshll.u32 [#allocation2], 4
      %s17 = int_to_ptr.vmem [resolvable:$true] %s16
      %22 = dma.hbm_to_vmem [thread:$0]  %s1, 2048, %s17, [#allocation3], 128, 128, 8
    $region9: #{tpu_custom_call.1} parent=1 // pred_fallthru
      _
    // Predicated region
    $region10: #{tpu_custom_call.1} parent=1 // pred_check
      _
    $region11: #{tpu_custom_call.1} parent=1 // pred_check_branch
      %24 = sbr.rel (0) target = $region13
    $region12: #{tpu_custom_call.1} parent=1 // pred_region
      %25 = dma.done [#allocation3], 2048
    $region13: #{tpu_custom_call.1} parent=1 // pred_fallthru
      _
    %v26 = vld [vmem:[%s0] sm:$0xff]
    %v27 = vld [vmem:[%s0 + $0x8] sm:$0xff]
    %v28 = vlaneseq
    %v29 = vand.u32 %v28, 127
    %v30 = vstv 0
    %v31 = vsub.s32 %v26, %v30
    %v32 = vsub.s32 %v27, %v30
    %33 = vset.pattern.permute.xlu0 0
    %34 = vperm.xlu0 %33, %v31
    %v35 = vpop.permute.xlu0 %34
    %36 = vset.pattern.permute.xlu0 0
    %37 = vperm.xlu0 %36, %v32
    %v38 = vpop.permute.xlu0 %37
    %vm39 = vcmp.eq.s32.totalorder %v29, %v35
    %vm40 = vcmp.eq.s32.totalorder %v29, %v38
    %v41 = vsel %vm39, 1, 0
    %v42 = vsel %vm40, 1, 0
    %v43 = vcvt.s32.f32 %v41
    %v44 = vcvt.s32.f32 %v42
    %v45 = vld [vmem:[#allocation2] sm:$0xff]
    %v46 = vld [vmem:[#allocation2 + $0x8] sm:$0xff]
    %v47 = vld [vmem:[#allocation2 + $0x10] sm:$0xff]
    %v48 = vld [vmem:[#allocation2 + $0x18] sm:$0xff]
    %v49 = vld [vmem:[#allocation2 + $0x20] sm:$0xff]
    %v50 = vld [vmem:[#allocation2 + $0x28] sm:$0xff]
    %v51 = vld [vmem:[#allocation2 + $0x30] sm:$0xff]
    %v52 = vld [vmem:[#allocation2 + $0x38] sm:$0xff]
    %v53 = vld [vmem:[#allocation2 + $0x40] sm:$0xff]
    %v54 = vld [vmem:[#allocation2 + $0x48] sm:$0xff]
    %v55 = vld [vmem:[#allocation2 + $0x50] sm:$0xff]
    %v56 = vld [vmem:[#allocation2 + $0x58] sm:$0xff]
    %v57 = vld [vmem:[#allocation2 + $0x60] sm:$0xff]
    %v58 = vld [vmem:[#allocation2 + $0x68] sm:$0xff]
    %v59 = vld [vmem:[#allocation2 + $0x70] sm:$0xff]
    %v60 = vld [vmem:[#allocation2 + $0x78] sm:$0xff]
    %61 = vmatprep.subr.mxu0 0.0
    %62 = vmatpush1.msra.mxu0 %v45
    %63 = vmatprep.subr.mxu0 0.0
    %64 = vmatpush1.msra.mxu0 %v46
    %65 = vmatprep.subr.mxu0 0.0
    %66 = vmatpush1.msra.mxu0 %v47
    %67 = vmatprep.subr.mxu0 0.0
    %68 = vmatpush1.msra.mxu0 %v48
    %69 = vmatprep.subr.mxu0 0.0
    %70 = vmatpush1.msra.mxu0 %v49
    %71 = vmatprep.subr.mxu0 0.0
    %72 = vmatpush1.msra.mxu0 %v50
    %73 = vmatprep.subr.mxu0 0.0
    %74 = vmatpush1.msra.mxu0 %v51
    %75 = vmatprep.subr.mxu0 0.0
    %76 = vmatpush1.msra.mxu0 %v52
    %77 = vmatprep.subr.mxu0 0.0
    %78 = vmatpush1.msra.mxu0 %v53
    %79 = vmatprep.subr.mxu0 0.0
    %80 = vmatpush1.msra.mxu0 %v54
    %81 = vmatprep.subr.mxu0 0.0
    %82 = vmatpush1.msra.mxu0 %v55
    %83 = vmatprep.subr.mxu0 0.0
    %84 = vmatpush1.msra.mxu0 %v56
    %85 = vmatprep.subr.mxu0 0.0
    %86 = vmatpush1.msra.mxu0 %v57
    %87 = vmatprep.subr.mxu0 0.0
    %88 = vmatpush1.msra.mxu0 %v58
    %89 = vmatprep.subr.mxu0 0.0
    %90 = vmatpush1.msra.mxu0 %v59
    %91 = vmatprep.subr.mxu0 0.0
    %92 = vmatpush1.msra.mxu0 %v60
    %93 = vmatprep.subr.mxu0 0.0
    %94 = vmatpush1.msra.mxu0 0.0
    %95 = vmatprep.subr.mxu0 0.0
    %96 = vmatpush1.msra.mxu0 0.0
    %97 = vmatprep.subr.mxu0 0.0
    %98 = vmatpush1.msra.mxu0 0.0
    %99 = vmatprep.subr.mxu0 0.0
    %100 = vmatpush1.msra.mxu0 0.0
    %101 = vmatprep.subr.mxu0 0.0
    %102 = vmatpush1.msra.mxu0 0.0
    %103 = vmatprep.subr.mxu0 0.0
    %104 = vmatpush1.msra.mxu0 0.0
    %105 = vmatprep.subr.mxu0 0.0
    %106 = vmatpush1.msra.mxu0 0.0
    %107 = vmatprep.subr.mxu0 0.0
    %108 = vmatpush1.msra.mxu0 0.0
    %109 = vmatprep.subr.mxu0 0.0
    %110 = vmatpush1.msra.mxu0 0.0
    %111 = vmatprep.subr.mxu0 0.0
    %112 = vmatpush1.msra.mxu0 0.0
    %113 = vmatprep.subr.mxu0 0.0
    %114 = vmatpush1.msra.mxu0 0.0
    %115 = vmatprep.subr.mxu0 0.0
    %116 = vmatpush1.msra.mxu0 0.0
    %117 = vmatprep.subr.mxu0 0.0
    %118 = vmatpush1.msra.mxu0 0.0
    %119 = vmatprep.subr.mxu0 0.0
    %120 = vmatpush1.msra.mxu0 0.0
    %121 = vmatprep.subr.mxu0 0.0
    %122 = vmatpush1.msra.mxu0 0.0
    %123 = vmatprep.subr.mxu0 0.0
    %124 = vmatpush1.msra.mxu0 0.0
    %125 = vmatprep.mubr.f32.mxu0 0.0
    %126 = vmatmul.mubr.f32.gmra.mrb[0].mxu0 %v43
    %v127 = vpop.f32.mrb[0].mxu0
    %v128 = vadd.f32 0.0, %v127
    %v129 = vpop.f32.mrb[0].mxu0
    %130 = vmatprep.mubr.f32.mxu0 0.0
    %131 = vmatmul.mubr.f32.gmra.mrb[0].mxu0 %v44
    %v132 = vpop.f32.mrb[0].mxu0
    %v133 = vadd.f32 0.0, %v132
    %v134 = vpop.f32.mrb[0].mxu0
    %135 = vdwg.mxu0
    %136 = vst [vmem:[#allocation5] sm:$0xff] %v128
    %137 = vst [vmem:[#allocation5 + $0x8] sm:$0xff] %v133
    // Predicated region
    $region14: #{tpu_custom_call.1} parent=1 // pred_check
      _
    $region15: #{tpu_custom_call.1} parent=1 // pred_check_branch
      %139 = sbr.rel (0) target = $region17
    $region16: #{tpu_custom_call.1} parent=1 // pred_region
      %s141 = ssub.s32 256, 256
      %142 = vsyncadd [#allocation4], %s141
      %s143 = sshll.u32 [#allocation5], 4
      %s144 = int_to_ptr.vmem [resolvable:$true] %s143
      %149 = dma.vmem_to_hbm [thread:$0]  %s144, 256, %s2, [#allocation4], 128, 128, 8
    $region17: #{tpu_custom_call.1} parent=1 // pred_fallthru
      _
    // Predicated region
    $region18: #{tpu_custom_call.1} parent=1 // pred_check
      _
    $region19: #{tpu_custom_call.1} parent=1 // pred_check_branch
      %151 = sbr.rel (0) target = $region21
    $region20: #{tpu_custom_call.1} parent=1 // pred_region
      %152 = dma.done [#allocation4], 256
    $region21: #{tpu_custom_call.1} parent=1 // pred_fallthru
      _
    %153 = vsyncpa [#allocation3], 1
    %154 = vsyncpa [#allocation4], 1

</llo_original>
